<compile_context>
chip_gen: v5e
topology: v5e:2x2
jax: 0.10.0
libtpu: 0.0.40
codegen_flags: <defaults>
</compile_context>

<pallas_src>
import functools

import numpy as np
import jax
import jax.numpy as jnp
from jax.experimental import pallas as pl
from jax.experimental.pallas import tpu as pltpu


# ------------------------------ Pallas kernel ------------------------------

def _d_block_kernel(xs2d_ref, xpool_ref, w1_ref, w2_ref, ws_ref, bs_ref, g_ref,
                    o_ref, *, learned_shortcut):
    # xs2d_ref : (1, Ho+1, Wo+1, 4*Cin)  bf16  space-to-depth of zero-padded x
    # xpool_ref: (1, Ho,   Wo,   Cin)    bf16  2x2 average-pooled x (shortcut)
    # w1_ref   : (16*Cin, Cout)          bf16  conv 4x4 s2 weights (im2col layout)
    # w2_ref   : (9*Cout, Cout)          bf16  conv 3x3 s1 weights (im2col layout)
    # ws_ref   : (Cin, Cout)             bf16  1x1 shortcut conv weights
    # bs_ref   : (1, Cout)               f32   shortcut bias
    # g_ref    : (1, 1)                  f32   gamma
    # o_ref    : (1, Ho*Wo, Cout)        f32
    Ho, Wo, Cin = xpool_ref.shape[1], xpool_ref.shape[2], xpool_ref.shape[3]
    Cout = o_ref.shape[2]
    C4 = xs2d_ref.shape[3]
    M = Ho * Wo

    # ---- conv_r[0]: 4x4 stride-2 conv == 2x2 stride-1 conv on s2d input ------
    # single im2col matmul, K = 4 * 4*Cin
    xs = xs2d_ref[0]                                            # (Ho+1, Wo+1, 4Cin)
    taps1 = [xs[a:a + Ho, b:b + Wo, :].reshape(M, C4)
             for a in range(2) for b in range(2)]
    im1 = jnp.concatenate(taps1, axis=1)                        # (M, 16*Cin)
    h = jnp.dot(im1, w1_ref[...], preferred_element_type=jnp.float32)  # (M, Cout)
    h = jnp.where(h >= 0.0, h, 0.2 * h)                         # LeakyReLU(0.2)

    # ---- zero "same"-padding of the intermediate, built in-register ----------
    h3 = h.reshape(Ho, Wo, Cout).astype(jnp.bfloat16)
    zc = jnp.zeros((Ho, 1, Cout), jnp.bfloat16)
    hrow = jnp.concatenate([zc, h3, zc], axis=1)                # (Ho, Wo+2, Cout)
    zr = jnp.zeros((1, Wo + 2, Cout), jnp.bfloat16)
    hp = jnp.concatenate([zr, hrow, zr], axis=0)                # (Ho+2, Wo+2, Cout)

    # ---- conv_r[2]: 3x3 stride-1 conv, single im2col matmul, K = 9*Cout ------
    taps2 = [hp[kh:kh + Ho, kw:kw + Wo, :].reshape(M, Cout)
             for kh in range(3) for kw in range(3)]
    im2 = jnp.concatenate(taps2, axis=1)                        # (M, 9*Cout)
    res = jnp.dot(im2, w2_ref[...], preferred_element_type=jnp.float32)
    res = jnp.where(res >= 0.0, res, 0.2 * res)                 # LeakyReLU(0.2)

    # ---- shortcut: avg-pool (done in wrapper, commutes with 1x1 conv) --------
    xp = xpool_ref[0].reshape(M, Cin)
    if learned_shortcut:
        sc = jnp.dot(xp, ws_ref[...],
                     preferred_element_type=jnp.float32) + bs_ref[...]
    else:
        sc = xp.astype(jnp.float32)                             # fin == fout

    # ---- residual combine -----------------------------------------------------
    o_ref[0] = sc + g_ref[...] * res


# ------------------------------ Python wrapper ------------------------------

def d_block(x_nchw, params, *, downsample=True):
    """Forward pass of D_Block. x_nchw: (B, fin, H, W) float32, output NCHW."""
    if not downsample:
        # The reference module with downsample=False produces mismatched shapes
        # (conv_r always strides by 2); only the meaningful configuration is kept.
        # TODO(synk): support downsample=False if a shape-consistent use appears.
        raise NotImplementedError("D_Block Pallas kernel assumes downsample=True")

    w1, w2, ws, bs, gamma = (params["w1"], params["w2"], params["ws"],
                             params["bs"], params["gamma"])
    x = jnp.transpose(x_nchw, (0, 2, 3, 1))                     # NCHW -> NHWC
    B, H, W, Cin = x.shape
    Cout = w1.shape[-1]
    Ho, Wo = H // 2, W // 2
    learned_shortcut = (Cin != Cout)
    if not learned_shortcut:
        assert Cin == Cout

    # --- input prep (cheap XLA glue: pad + space-to-depth + 2x2 mean) ---------
    xpad = jnp.pad(x, ((0, 0), (1, 1), (1, 1), (0, 0)))         # (B, H+2, W+2, Cin)
    xs2d = xpad.reshape(B, Ho + 1, 2, Wo + 1, 2, Cin)           # (B,i,dh,j,dw,c)
    xs2d = jnp.transpose(xs2d, (0, 1, 3, 2, 4, 5)).reshape(B, Ho + 1, Wo + 1, 4 * Cin)
    xs2d = xs2d.astype(jnp.bfloat16)
    # 2x2 average pool of x; the 1x1 conv is linear so pooling first is identical.
    xpool = x.reshape(B, Ho, 2, Wo, 2, Cin).mean(axis=(2, 4)).astype(jnp.bfloat16)

    # --- weight prep: im2col-compatible matrices, bf16 ------------------------
    # conv1 (4,4,Cin,Cout): rows ordered as (a, b, dh, dw, c) with kh=2a+dh, kw=2b+dw
    w1m = (w1.reshape(2, 2, 2, 2, Cin, Cout)
             .transpose(0, 2, 1, 3, 4, 5)
             .reshape(16 * Cin, Cout).astype(jnp.bfloat16))
    w2m = w2.reshape(9 * Cout, Cout).astype(jnp.bfloat16)        # (kh, kw, c) order
    wsm = ws.reshape(Cin, Cout).astype(jnp.bfloat16)
    bsm = bs.reshape(1, Cout).astype(jnp.float32)
    gm = gamma.reshape(1, 1).astype(jnp.float32)

    kernel = functools.partial(_d_block_kernel, learned_shortcut=learned_shortcut)
    out_flat = pl.pallas_call(
        kernel,
        grid=(B,),
        in_specs=[
            pl.BlockSpec((1, Ho + 1, Wo + 1, 4 * Cin), lambda i: (i, 0, 0, 0)),
            pl.BlockSpec((1, Ho, Wo, Cin), lambda i: (i, 0, 0, 0)),
            pl.BlockSpec((16 * Cin, Cout), lambda i: (0, 0)),
            pl.BlockSpec((9 * Cout, Cout), lambda i: (0, 0)),
            pl.BlockSpec((Cin, Cout), lambda i: (0, 0)),
            pl.BlockSpec((1, Cout), lambda i: (0, 0)),
            pl.BlockSpec((1, 1), lambda i: (0, 0)),
        ],
        out_specs=pl.BlockSpec((1, Ho * Wo, Cout), lambda i: (i, 0, 0)),
        out_shape=jax.ShapeDtypeStruct((B, Ho * Wo, Cout), jnp.float32),
        compiler_params=pltpu.CompilerParams(dimension_semantics=("parallel",)),
    )(xs2d, xpool, w1m, w2m, wsm, bsm, gm)

    out = out_flat.reshape(B, Ho, Wo, Cout)
    return jnp.transpose(out, (0, 3, 1, 2))                      # NHWC -> NCHW


# ------------------------- pure-JAX reference (check) ------------------------

def d_block_reference(x, params):
    dn = ("NCHW", "HWIO", "NCHW")
    h = jax.lax.conv_general_dilated(x, params["w1"], (2, 2), ((1, 1), (1, 1)),
                                     dimension_numbers=dn)
    h = jnp.where(h >= 0, h, 0.2 * h)
    h = jax.lax.conv_general_dilated(h, params["w2"], (1, 1), ((1, 1), (1, 1)),
                                     dimension_numbers=dn)
    res = jnp.where(h >= 0, h, 0.2 * h)
    sc = jax.lax.conv_general_dilated(x, params["ws"], (1, 1), ((0, 0), (0, 0)),
                                      dimension_numbers=dn)
    sc = sc + params["bs"][None, :, None, None]
    B, C, Hh, Ww = sc.shape
    sc = sc.reshape(B, C, Hh // 2, 2, Ww // 2, 2).mean(axis=(3, 5))
    return sc + params["gamma"].reshape(()) * res


# ----------------------------------- main ------------------------------------

if __name__ == "__main__":
    B, fin, fout, H, W = 2, 4, 8, 16, 16

    key = jax.random.PRNGKey(0)
    k1, k2, k3, k4, kx = jax.random.split(key, 5)

    def uinit(k, shape, fan_in):
        bound = 1.0 / np.sqrt(fan_in)
        return jax.random.uniform(k, shape, jnp.float32, -bound, bound)

    params = {
        "w1": uinit(k1, (4, 4, fin, fout), fin * 16),   # conv 4x4 s2, bias=False
        "w2": uinit(k2, (3, 3, fout, fout), fout * 9),  # conv 3x3 s1, bias=False
        "ws": uinit(k3, (1, 1, fin, fout), fin),        # conv 1x1 shortcut
        "bs": uinit(k4, (fout,), fin),
        # PyTorch zero-inits gamma; use a nonzero value so the residual branch
        # actually contributes in this demo.
        "gamma": jnp.full((1,), 0.5, jnp.float32),
    }

    x = jax.random.normal(kx, (B, fin, H, W), dtype=jnp.float32)

    fwd = jax.jit(functools.partial(d_block, downsample=True))
    out = jax.block_until_ready(fwd(x, params))

    assert out.shape == (B, fout, H // 2, W // 2), out.shape
    assert bool(jnp.all(jnp.isfinite(out)))

    # correctness vs pure-JAX reference (loose tolerance: bf16 MXU operands)
    ref = jax.block_until_ready(d_block_reference(x, params))
    max_err = float(jnp.max(jnp.abs(out - ref)))
    assert max_err < 5e-2, f"max abs error {max_err}"

    print("KERNEL_OK")
</pallas_src>

<mosaic_0001>
module attributes {stable_mosaic.version = 11 : i64} {
  func.func @_d_block_kernel(%arg0: i32, %arg1: memref<1x9x9x16xbf16, #tpu.memory_space<vmem>>, %arg2: memref<1x8x8x4xbf16, #tpu.memory_space<vmem>>, %arg3: memref<64x8xbf16, #tpu.memory_space<vmem>>, %arg4: memref<72x8xbf16, #tpu.memory_space<vmem>>, %arg5: memref<4x8xbf16, #tpu.memory_space<vmem>>, %arg6: memref<1x8xf32, #tpu.memory_space<vmem>>, %arg7: memref<1x1xf32, #tpu.memory_space<vmem>>, %arg8: memref<1x64x8xf32, #tpu.memory_space<vmem>>) attributes {dimension_semantics = [#tpu.dimension_semantics<parallel>], iteration_bounds = array<i64: 2>, scalar_prefetch = 0 : i64, scratch_operands = 0 : i64, tpu.core_type = #tpu.core_type<tc>, window_params = [{transform_indices = @transform_0, window_bounds = array<i64: 1, 9, 9, 16>}, {transform_indices = @transform_1, window_bounds = array<i64: 1, 8, 8, 4>}, {pipeline_mode = #tpu.pipeline_mode<synchronous>, transform_indices = @transform_2, window_bounds = array<i64: 64, 8>}, {pipeline_mode = #tpu.pipeline_mode<synchronous>, transform_indices = @transform_3, window_bounds = array<i64: 72, 8>}, {pipeline_mode = #tpu.pipeline_mode<synchronous>, transform_indices = @transform_4, window_bounds = array<i64: 4, 8>}, {pipeline_mode = #tpu.pipeline_mode<synchronous>, transform_indices = @transform_5, window_bounds = array<i64: 1, 8>}, {pipeline_mode = #tpu.pipeline_mode<synchronous>, transform_indices = @transform_6, window_bounds = array<i64: 1, 1>}, {transform_indices = @transform_7, window_bounds = array<i64: 1, 64, 8>}]} {
    %c0 = arith.constant 0 : index
    %c0_0 = arith.constant 0 : index
    %c0_1 = arith.constant 0 : index
    %c0_2 = arith.constant 0 : index
    %0 = vector.load %arg1[%c0, %c0_0, %c0_1, %c0_2] : memref<1x9x9x16xbf16, #tpu.memory_space<vmem>>, vector<1x9x9x16xbf16>
    %1 = vector.shape_cast %0 : vector<1x9x9x16xbf16> to vector<9x9x16xbf16>
    %2 = vector.extract_strided_slice %1 {offsets = [0, 0, 0], sizes = [8, 8, 16], strides = [1, 1, 1]} : vector<9x9x16xbf16> to vector<8x8x16xbf16>
    %3 = vector.shape_cast %2 : vector<8x8x16xbf16> to vector<64x16xbf16>
    %4 = vector.extract_strided_slice %1 {offsets = [0, 1, 0], sizes = [8, 8, 16], strides = [1, 1, 1]} : vector<9x9x16xbf16> to vector<8x8x16xbf16>
    %5 = vector.shape_cast %4 : vector<8x8x16xbf16> to vector<64x16xbf16>
    %6 = vector.extract_strided_slice %1 {offsets = [1, 0, 0], sizes = [8, 8, 16], strides = [1, 1, 1]} : vector<9x9x16xbf16> to vector<8x8x16xbf16>
    %7 = vector.shape_cast %6 : vector<8x8x16xbf16> to vector<64x16xbf16>
    %8 = vector.extract_strided_slice %1 {offsets = [1, 1, 0], sizes = [8, 8, 16], strides = [1, 1, 1]} : vector<9x9x16xbf16> to vector<8x8x16xbf16>
    %9 = vector.shape_cast %8 : vector<8x8x16xbf16> to vector<64x16xbf16>
    %10 = tpu.concatenate %3, %5, %7, %9 in 1 : vector<64x16xbf16>, vector<64x16xbf16>, vector<64x16xbf16>, vector<64x16xbf16> -> vector<64x64xbf16>
    %c0_3 = arith.constant 0 : index
    %c0_4 = arith.constant 0 : index
    %11 = vector.load %arg3[%c0_3, %c0_4] : memref<64x8xbf16, #tpu.memory_space<vmem>>, vector<64x8xbf16>
    %cst = arith.constant dense<0.000000e+00> : vector<64x8xf32>
    %12 = tpu.matmul %10, %11, %cst {dimension_numbers = #tpu.dot_dimension_numbers<[1], [0], [0], [1], [0, 0, 1, 1], [], []>} : vector<64x64xbf16>, vector<64x8xbf16>, vector<64x8xf32> -> vector<64x8xf32>
    %cst_5 = arith.constant 0.000000e+00 : f32
    %13 = vector.broadcast %cst_5 : f32 to vector<64x8xf32>
    %14 = arith.cmpf oge, %12, %13 : vector<64x8xf32>
    %cst_6 = arith.constant 2.000000e-01 : f32
    %15 = vector.broadcast %cst_6 : f32 to vector<64x8xf32>
    %16 = arith.mulf %15, %12 : vector<64x8xf32>
    %17 = arith.select %14, %12, %16 : vector<64x8xi1>, vector<64x8xf32>
    %18 = vector.shape_cast %17 : vector<64x8xf32> to vector<8x8x8xf32>
    %19 = arith.truncf %18 : vector<8x8x8xf32> to vector<8x8x8xbf16>
    %cst_7 = arith.constant 0.000000e+00 : bf16
    %20 = vector.broadcast %cst_7 : bf16 to vector<8x1x8xbf16>
    %21 = tpu.concatenate %20, %19, %20 in 1 : vector<8x1x8xbf16>, vector<8x8x8xbf16>, vector<8x1x8xbf16> -> vector<8x10x8xbf16>
    %cst_8 = arith.constant 0.000000e+00 : bf16
    %22 = vector.broadcast %cst_8 : bf16 to vector<1x10x8xbf16>
    %23 = tpu.concatenate %22, %21, %22 in 0 : vector<1x10x8xbf16>, vector<8x10x8xbf16>, vector<1x10x8xbf16> -> vector<10x10x8xbf16>
    %24 = vector.extract_strided_slice %23 {offsets = [0, 0, 0], sizes = [8, 8, 8], strides = [1, 1, 1]} : vector<10x10x8xbf16> to vector<8x8x8xbf16>
    %25 = vector.shape_cast %24 : vector<8x8x8xbf16> to vector<64x8xbf16>
    %26 = vector.extract_strided_slice %23 {offsets = [0, 1, 0], sizes = [8, 8, 8], strides = [1, 1, 1]} : vector<10x10x8xbf16> to vector<8x8x8xbf16>
    %27 = vector.shape_cast %26 : vector<8x8x8xbf16> to vector<64x8xbf16>
    %28 = vector.extract_strided_slice %23 {offsets = [0, 2, 0], sizes = [8, 8, 8], strides = [1, 1, 1]} : vector<10x10x8xbf16> to vector<8x8x8xbf16>
    %29 = vector.shape_cast %28 : vector<8x8x8xbf16> to vector<64x8xbf16>
    %30 = vector.extract_strided_slice %23 {offsets = [1, 0, 0], sizes = [8, 8, 8], strides = [1, 1, 1]} : vector<10x10x8xbf16> to vector<8x8x8xbf16>
    %31 = vector.shape_cast %30 : vector<8x8x8xbf16> to vector<64x8xbf16>
    %32 = vector.extract_strided_slice %23 {offsets = [1, 1, 0], sizes = [8, 8, 8], strides = [1, 1, 1]} : vector<10x10x8xbf16> to vector<8x8x8xbf16>
    %33 = vector.shape_cast %32 : vector<8x8x8xbf16> to vector<64x8xbf16>
    %34 = vector.extract_strided_slice %23 {offsets = [1, 2, 0], sizes = [8, 8, 8], strides = [1, 1, 1]} : vector<10x10x8xbf16> to vector<8x8x8xbf16>
    %35 = vector.shape_cast %34 : vector<8x8x8xbf16> to vector<64x8xbf16>
    %36 = vector.extract_strided_slice %23 {offsets = [2, 0, 0], sizes = [8, 8, 8], strides = [1, 1, 1]} : vector<10x10x8xbf16> to vector<8x8x8xbf16>
    %37 = vector.shape_cast %36 : vector<8x8x8xbf16> to vector<64x8xbf16>
    %38 = vector.extract_strided_slice %23 {offsets = [2, 1, 0], sizes = [8, 8, 8], strides = [1, 1, 1]} : vector<10x10x8xbf16> to vector<8x8x8xbf16>
    %39 = vector.shape_cast %38 : vector<8x8x8xbf16> to vector<64x8xbf16>
    %40 = vector.extract_strided_slice %23 {offsets = [2, 2, 0], sizes = [8, 8, 8], strides = [1, 1, 1]} : vector<10x10x8xbf16> to vector<8x8x8xbf16>
    %41 = vector.shape_cast %40 : vector<8x8x8xbf16> to vector<64x8xbf16>
    %42 = tpu.concatenate %25, %27, %29, %31, %33, %35, %37, %39, %41 in 1 : vector<64x8xbf16>, vector<64x8xbf16>, vector<64x8xbf16>, vector<64x8xbf16>, vector<64x8xbf16>, vector<64x8xbf16>, vector<64x8xbf16>, vector<64x8xbf16>, vector<64x8xbf16> -> vector<64x72xbf16>
    %c0_9 = arith.constant 0 : index
    %c0_10 = arith.constant 0 : index
    %43 = vector.load %arg4[%c0_9, %c0_10] : memref<72x8xbf16, #tpu.memory_space<vmem>>, vector<72x8xbf16>
    %cst_11 = arith.constant dense<0.000000e+00> : vector<64x8xf32>
    %44 = tpu.matmul %42, %43, %cst_11 {dimension_numbers = #tpu.dot_dimension_numbers<[1], [0], [0], [1], [0, 0, 1, 1], [], []>} : vector<64x72xbf16>, vector<72x8xbf16>, vector<64x8xf32> -> vector<64x8xf32>
    %cst_12 = arith.constant 0.000000e+00 : f32
    %45 = vector.broadcast %cst_12 : f32 to vector<64x8xf32>
    %46 = arith.cmpf oge, %44, %45 : vector<64x8xf32>
    %cst_13 = arith.constant 2.000000e-01 : f32
    %47 = vector.broadcast %cst_13 : f32 to vector<64x8xf32>
    %48 = arith.mulf %47, %44 : vector<64x8xf32>
    %49 = arith.select %46, %44, %48 : vector<64x8xi1>, vector<64x8xf32>
    %c0_14 = arith.constant 0 : index
    %c0_15 = arith.constant 0 : index
    %c0_16 = arith.constant 0 : index
    %c0_17 = arith.constant 0 : index
    %50 = vector.load %arg2[%c0_14, %c0_15, %c0_16, %c0_17] : memref<1x8x8x4xbf16, #tpu.memory_space<vmem>>, vector<1x8x8x4xbf16>
    %51 = vector.shape_cast %50 : vector<1x8x8x4xbf16> to vector<8x8x4xbf16>
    %52 = vector.shape_cast %51 : vector<8x8x4xbf16> to vector<64x4xbf16>
    %c0_18 = arith.constant 0 : index
    %c0_19 = arith.constant 0 : index
    %53 = vector.load %arg5[%c0_18, %c0_19] : memref<4x8xbf16, #tpu.memory_space<vmem>>, vector<4x8xbf16>
    %cst_20 = arith.constant dense<0.000000e+00> : vector<64x8xf32>
    %54 = tpu.matmul %52, %53, %cst_20 {dimension_numbers = #tpu.dot_dimension_numbers<[1], [0], [0], [1], [0, 0, 1, 1], [], []>} : vector<64x4xbf16>, vector<4x8xbf16>, vector<64x8xf32> -> vector<64x8xf32>
    %c0_21 = arith.constant 0 : index
    %c0_22 = arith.constant 0 : index
    %55 = vector.load %arg6[%c0_21, %c0_22] : memref<1x8xf32, #tpu.memory_space<vmem>>, vector<1x8xf32>
    %56 = vector.broadcast %55 : vector<1x8xf32> to vector<64x8xf32>
    %57 = arith.addf %54, %56 : vector<64x8xf32>
    %c0_23 = arith.constant 0 : index
    %c0_24 = arith.constant 0 : index
    %58 = vector.load %arg7[%c0_23, %c0_24] : memref<1x1xf32, #tpu.memory_space<vmem>>, vector<1x1xf32>
    %59 = vector.broadcast %58 : vector<1x1xf32> to vector<64x8xf32>
    %60 = arith.mulf %59, %49 : vector<64x8xf32>
    %61 = arith.addf %57, %60 : vector<64x8xf32>
    %c0_25 = arith.constant 0 : index
    %c0_26 = arith.constant 0 : index
    %c0_27 = arith.constant 0 : index
    %62 = vector.load %arg8[%c0_25, %c0_26, %c0_27] : memref<1x64x8xf32, #tpu.memory_space<vmem>>, vector<1x64x8xf32>
    %63 = vector.shape_cast %62 : vector<1x64x8xf32> to vector<64x8xf32>
    %64 = vector.shape_cast %61 : vector<64x8xf32> to vector<1x64x8xf32>
    tpu.vector_store %arg8[%c0_25, %c0_26, %c0_27], %64 {strides = array<i32>} : memref<1x64x8xf32, #tpu.memory_space<vmem>>, vector<1x64x8xf32>,
    return
  }
  func.func @transform_0(%arg0: i32) -> (i32, i32, i32, i32) {
    %c0_i32 = arith.constant 0 : i32
    %c0_i32_0 = arith.constant 0 : i32
    %c0_i32_1 = arith.constant 0 : i32
    %c0_i32_2 = arith.constant 0 : i32
    return %arg0, %c0_i32, %c0_i32_0, %c0_i32_1 : i32, i32, i32, i32
  }
  func.func @transform_1(%arg0: i32) -> (i32, i32, i32, i32) {
    %c0_i32 = arith.constant 0 : i32
    %c0_i32_0 = arith.constant 0 : i32
    %c0_i32_1 = arith.constant 0 : i32
    %c0_i32_2 = arith.constant 0 : i32
    return %arg0, %c0_i32, %c0_i32_0, %c0_i32_1 : i32, i32, i32, i32
  }
  func.func @transform_2(%arg0: i32) -> (i32, i32) {
    %c0_i32 = arith.constant 0 : i32
    %c0_i32_0 = arith.constant 0 : i32
    %c0_i32_1 = arith.constant 0 : i32
    return %c0_i32, %c0_i32_0 : i32, i32
  }
  func.func @transform_3(%arg0: i32) -> (i32, i32) {
    %c0_i32 = arith.constant 0 : i32
    %c0_i32_0 = arith.constant 0 : i32
    %c0_i32_1 = arith.constant 0 : i32
    return %c0_i32, %c0_i32_0 : i32, i32
  }
  func.func @transform_4(%arg0: i32) -> (i32, i32) {
    %c0_i32 = arith.constant 0 : i32
    %c0_i32_0 = arith.constant 0 : i32
    %c0_i32_1 = arith.constant 0 : i32
    return %c0_i32, %c0_i32_0 : i32, i32
  }
  func.func @transform_5(%arg0: i32) -> (i32, i32) {
    %c0_i32 = arith.constant 0 : i32
    %c0_i32_0 = arith.constant 0 : i32
    %c0_i32_1 = arith.constant 0 : i32
    return %c0_i32, %c0_i32_0 : i32, i32
  }
  func.func @transform_6(%arg0: i32) -> (i32, i32) {
    %c0_i32 = arith.constant 0 : i32
    %c0_i32_0 = arith.constant 0 : i32
    %c0_i32_1 = arith.constant 0 : i32
    return %c0_i32, %c0_i32_0 : i32, i32
  }
  func.func @transform_7(%arg0: i32) -> (i32, i32, i32) {
    %c0_i32 = arith.constant 0 : i32
    %c0_i32_0 = arith.constant 0 : i32
    %c0_i32_1 = arith.constant 0 : i32
    return %arg0, %c0_i32, %c0_i32_0 : i32, i32, i32
  }
}

</mosaic_0001>

<llo_original>
// kernel: d_block.1
$region0: #{d_block.1}
  #allocation0 [shape = 'u32[]', space=smem, size = 0x4, offset = 0x4, fixed_abs, tag = 'smem constant byte address 0x4 - core index']
  #allocation1 [shape = 'u32[72,128]{1,0:T(1,128)}', space=vmem, size = 0x9000, scoped, tag = 'internal scratch']
  #allocation2 [shape = 'f32[1,1]{1,0:T(1,128)S(1)}', space=vmem, size = 0x200, scoped, tag = 'scoped memory for d_block.1']
  %s0 = inlined_call_operand.vmem [shape: bf16[2,9,9,16], index: 0, kind: input, shape index: {}]
  %s1 = inlined_call_operand.vmem [shape: bf16[2,8,8,4], index: 1, kind: input, shape index: {}]
  %s2 = inlined_call_operand.vmem [shape: bf16[64,8], index: 2, kind: input, shape index: {}]
  %s3 = inlined_call_operand.vmem [shape: bf16[72,8], index: 3, kind: input, shape index: {}]
  %s4 = inlined_call_operand.vmem [shape: bf16[4,8], index: 4, kind: input, shape index: {}]
  %s5 = inlined_call_operand.vmem [shape: f32[1,8], index: 5, kind: input, shape index: {}]
  %s6 = inlined_call_operand.<no memory space> [shape: f32[1,1], index: 6, kind: input, shape index: {}]
  %s7 = inlined_call_operand.vmem [shape: f32[2,64,8], index: 7, kind: output, shape index: {}]
  %s8 = sld [smem:[#allocation0]]
  $region61: #{d_block.1} parent=0
    _
  %s10 = ssub.s32 1, %s8
  %s11 = scalar_select 0, %s10, %s8
  %v12 = vstv %s6
  %13 = vst [vmem:[#allocation2] sm:$0x1] %v12
  loop: start=0, step=1, limit=4
  $region2: #{d_block.1} parent=0 // loop_pre_header
    _
  $region3: #{d_block.1} parent=0 // loop_header
    %s15 = sphi 0, %s19
    %p16 = scmp.ge.s32.totalorder %s15, 4
    %s25 = sphi 0, %s27
    %s28 = sphi 0, %s25
    %s29 = sphi 0, %s28
    %s45 = sphi 0, %s29
    %s51 = sphi 0, %s53
    %s54 = sphi 0, %s51
    %s55 = sphi 0, %s54
    %s71 = sphi 0, %s55
    %s75 = sphi 0, %s75
    %s77 = sphi 0, %s75
    %s78 = sphi 0, %s77
    %s92 = sphi 0, %s78
    %s96 = sphi 0, %s96
    %s98 = sphi 0, %s96
    %s99 = sphi 0, %s98
    %s113 = sphi 0, %s99
    %s117 = sphi 0, %s117
    %s119 = sphi 0, %s117
    %s120 = sphi 0, %s119
    %s134 = sphi 0, %s120
    %s138 = sphi 0, %s138
    %s140 = sphi 0, %s138
    %s141 = sphi 0, %s140
    %s155 = sphi 0, %s141
    %s159 = sphi 0, %s159
    %s161 = sphi 0, %s159
    %s162 = sphi 0, %s161
    %s176 = sphi 0, %s162
    %s182 = sphi 0, %s184
    %s185 = sphi 0, %s182
    %s186 = sphi 0, %s185
    %s202 = sphi 0, %s186
  $region4: #{d_block.1} parent=0 // loop_header_branch
    %18 = sbr.rel (%p16) target = $region8
  $region5: #{d_block.1} parent=0 // loop_body
    %s20 = ssub.s32 %s15, 1
    %s21 = ssub.s32 %s15, 2
    %s22 = sadd.s32 %s15, 1
    %s23 = ssub.s32 %s15, %s22
    %p24 = scmp.eq.s32.totalorder %s23, 0
    %s26 = sadd.s32 %s25, 1
    %s27 = scalar_select %p24, %s25, %s26
    %p30 = pneg %p24
    %p31 = scmp.eq.s32.totalorder %s15, 1
    %p32 = por %p30, %p31
    %p33 = scmp.ne.s32.totalorder %s25, %s28
    %p34 = scmp.eq.s32.totalorder %s15, 0
    %p35 = por %p33, %p34
    %p36 = scmp.ne.s32.totalorder %s25, %s28
    %p37 = scmp.eq.s32.totalorder %s20, 1
    %p38 = por %p36, %p37
    %p39 = scmp.ne.s32.totalorder %s28, %s29
    %p40 = scmp.eq.s32.totalorder %s20, 0
    %p41 = por %p39, %p40
    %p42 = scmp.ne.s32.totalorder %s28, %s29
    %p43 = scmp.eq.s32.totalorder %s21, 1
    %p44 = por %p42, %p43
    %p46 = scmp.ne.s32.totalorder %s29, %s45
    %p47 = scmp.eq.s32.totalorder %s21, 0
    %p48 = por %p46, %p47
    %s49 = ssub.s32 %s15, %s22
    %p50 = scmp.eq.s32.totalorder %s49, 0
    %s52 = sadd.s32 %s51, 1
    %s53 = scalar_select %p50, %s51, %s52
    %p56 = pneg %p50
    %p57 = scmp.eq.s32.totalorder %s15, 1
    %p58 = por %p56, %p57
    %p59 = scmp.ne.s32.totalorder %s51, %s54
    %p60 = scmp.eq.s32.totalorder %s15, 0
    %p61 = por %p59, %p60
    %p62 = scmp.ne.s32.totalorder %s51, %s54
    %p63 = scmp.eq.s32.totalorder %s20, 1
    %p64 = por %p62, %p63
    %p65 = scmp.ne.s32.totalorder %s54, %s55
    %p66 = scmp.eq.s32.totalorder %s20, 0
    %p67 = por %p65, %p66
    %p68 = scmp.ne.s32.totalorder %s54, %s55
    %p69 = scmp.eq.s32.totalorder %s21, 1
    %p70 = por %p68, %p69
    %p72 = scmp.ne.s32.totalorder %s55, %s71
    %p73 = scmp.eq.s32.totalorder %s21, 0
    %p74 = por %p72, %p73
    %s76 = sadd.s32 %s75, 1
    %p79 = scmp.eq.s32.totalorder %s15, 1
    %p80 = scmp.ne.s32.totalorder %s75, %s77
    %p81 = scmp.eq.s32.totalorder %s15, 0
    %p82 = por %p80, %p81
    %p83 = scmp.ne.s32.totalorder %s75, %s77
    %p84 = scmp.eq.s32.totalorder %s20, 1
    %p85 = por %p83, %p84
    %p86 = scmp.ne.s32.totalorder %s77, %s78
    %p87 = scmp.eq.s32.totalorder %s20, 0
    %p88 = por %p86, %p87
    %p89 = scmp.ne.s32.totalorder %s77, %s78
    %p90 = scmp.eq.s32.totalorder %s21, 1
    %p91 = por %p89, %p90
    %p93 = scmp.ne.s32.totalorder %s78, %s92
    %p94 = scmp.eq.s32.totalorder %s21, 0
    %p95 = por %p93, %p94
    %s97 = sadd.s32 %s96, 1
    %p100 = scmp.eq.s32.totalorder %s15, 1
    %p101 = scmp.ne.s32.totalorder %s96, %s98
    %p102 = scmp.eq.s32.totalorder %s15, 0
    %p103 = por %p101, %p102
    %p104 = scmp.ne.s32.totalorder %s96, %s98
    %p105 = scmp.eq.s32.totalorder %s20, 1
    %p106 = por %p104, %p105
    %p107 = scmp.ne.s32.totalorder %s98, %s99
    %p108 = scmp.eq.s32.totalorder %s20, 0
    %p109 = por %p107, %p108
    %p110 = scmp.ne.s32.totalorder %s98, %s99
    %p111 = scmp.eq.s32.totalorder %s21, 1
    %p112 = por %p110, %p111
    %p114 = scmp.ne.s32.totalorder %s99, %s113
    %p115 = scmp.eq.s32.totalorder %s21, 0
    %p116 = por %p114, %p115
    %s118 = sadd.s32 %s117, 1
    %p121 = scmp.eq.s32.totalorder %s15, 1
    %p122 = scmp.ne.s32.totalorder %s117, %s119
    %p123 = scmp.eq.s32.totalorder %s15, 0
    %p124 = por %p122, %p123
    %p125 = scmp.ne.s32.totalorder %s117, %s119
    %p126 = scmp.eq.s32.totalorder %s20, 1
    %p127 = por %p125, %p126
    %p128 = scmp.ne.s32.totalorder %s119, %s120
    %p129 = scmp.eq.s32.totalorder %s20, 0
    %p130 = por %p128, %p129
    %p131 = scmp.ne.s32.totalorder %s119, %s120
    %p132 = scmp.eq.s32.totalorder %s21, 1
    %p133 = por %p131, %p132
    %p135 = scmp.ne.s32.totalorder %s120, %s134
    %p136 = scmp.eq.s32.totalorder %s21, 0
    %p137 = por %p135, %p136
    %s139 = sadd.s32 %s138, 1
    %p142 = scmp.eq.s32.totalorder %s15, 1
    %p143 = scmp.ne.s32.totalorder %s138, %s140
    %p144 = scmp.eq.s32.totalorder %s15, 0
    %p145 = por %p143, %p144
    %p146 = scmp.ne.s32.totalorder %s138, %s140
    %p147 = scmp.eq.s32.totalorder %s20, 1
    %p148 = por %p146, %p147
    %p149 = scmp.ne.s32.totalorder %s140, %s141
    %p150 = scmp.eq.s32.totalorder %s20, 0
    %p151 = por %p149, %p150
    %p152 = scmp.ne.s32.totalorder %s140, %s141
    %p153 = scmp.eq.s32.totalorder %s21, 1
    %p154 = por %p152, %p153
    %p156 = scmp.ne.s32.totalorder %s141, %s155
    %p157 = scmp.eq.s32.totalorder %s21, 0
    %p158 = por %p156, %p157
    %s160 = sadd.s32 %s159, 1
    %p163 = scmp.eq.s32.totalorder %s15, 1
    %p164 = scmp.ne.s32.totalorder %s159, %s161
    %p165 = scmp.eq.s32.totalorder %s15, 0
    %p166 = por %p164, %p165
    %p167 = scmp.ne.s32.totalorder %s159, %s161
    %p168 = scmp.eq.s32.totalorder %s20, 1
    %p169 = por %p167, %p168
    %p170 = scmp.ne.s32.totalorder %s161, %s162
    %p171 = scmp.eq.s32.totalorder %s20, 0
    %p172 = por %p170, %p171
    %p173 = scmp.ne.s32.totalorder %s161, %s162
    %p174 = scmp.eq.s32.totalorder %s21, 1
    %p175 = por %p173, %p174
    %p177 = scmp.ne.s32.totalorder %s162, %s176
    %p178 = scmp.eq.s32.totalorder %s21, 0
    %p179 = por %p177, %p178
    %s180 = ssub.s32 %s15, %s22
    %p181 = scmp.eq.s32.totalorder %s180, 0
    %s183 = sadd.s32 %s182, 1
    %s184 = scalar_select %p181, %s182, %s183
    %p187 = pneg %p181
    %p188 = scmp.eq.s32.totalorder %s15, 1
    %p189 = por %p187, %p188
    %p190 = scmp.ne.s32.totalorder %s182, %s185
    %p191 = scmp.eq.s32.totalorder %s15, 0
    %p192 = por %p190, %p191
    %p193 = scmp.ne.s32.totalorder %s182, %s185
    %p194 = scmp.eq.s32.totalorder %s20, 1
    %p195 = por %p193, %p194
    %p196 = scmp.ne.s32.totalorder %s185, %s186
    %p197 = scmp.eq.s32.totalorder %s20, 0
    %p198 = por %p196, %p197
    %p199 = scmp.ne.s32.totalorder %s185, %s186
    %p200 = scmp.eq.s32.totalorder %s21, 1
    %p201 = por %p199, %p200
    %p203 = scmp.ne.s32.totalorder %s186, %s202
    %p204 = scmp.eq.s32.totalorder %s21, 0
    %p205 = por %p203, %p204
    %p206 = scmp.le.s32.totalorder 1, %s15
    %p207 = scmp.lt.s32.totalorder %s15, 3
    %p208 = pnand %p206, %p207
    %p209 = pneg %p208
    // Predicated region
    $region9: #{d_block.1} parent=5 // pred_check
      _
    $region10: #{d_block.1} parent=5 // pred_check_branch
      %211 = sbr.rel (%p208) target = $region12
    $region11: #{d_block.1} parent=5 // pred_region
      %s212 = ssub.s32 %s15, 1
      // Predicated region
      $region13: #{d_block.1} parent=11 // pred_check
        %p213 = pneg %p88
      $region14: #{d_block.1} parent=11 // pred_check_branch
        %215 = sbr.rel (%p213) target = $region16
      $region15: #{d_block.1} parent=11 // pred_region
        _
      $region16: #{d_block.1} parent=11 // pred_fallthru
        _
      // Predicated region
      $region17: #{d_block.1} parent=11 // pred_check
        %p216 = pneg %p109
      $region18: #{d_block.1} parent=11 // pred_check_branch
        %218 = sbr.rel (%p216) target = $region20
      $region19: #{d_block.1} parent=11 // pred_region
        _
      $region20: #{d_block.1} parent=11 // pred_fallthru
        _
      // Predicated region
      $region21: #{d_block.1} parent=11 // pred_check
        %p219 = pneg %p130
      $region22: #{d_block.1} parent=11 // pred_check_branch
        %221 = sbr.rel (%p219) target = $region24
      $region23: #{d_block.1} parent=11 // pred_region
        _
      $region24: #{d_block.1} parent=11 // pred_fallthru
        _
      // Predicated region
      $region25: #{d_block.1} parent=11 // pred_check
        %p222 = pneg %p151
      $region26: #{d_block.1} parent=11 // pred_check_branch
        %224 = sbr.rel (%p222) target = $region28
      $region27: #{d_block.1} parent=11 // pred_region
        _
      $region28: #{d_block.1} parent=11 // pred_fallthru
        _
      // Predicated region
      $region29: #{d_block.1} parent=11 // pred_check
        %p225 = pneg %p172
      $region30: #{d_block.1} parent=11 // pred_check_branch
        %227 = sbr.rel (%p225) target = $region32
      $region31: #{d_block.1} parent=11 // pred_region
        _
      $region32: #{d_block.1} parent=11 // pred_fallthru
        _
    $region12: #{d_block.1} parent=5 // pred_fallthru
      _
    %p228 = scmp.lt.s32.totalorder %s15, 2
    // Predicated region
    $region33: #{d_block.1} parent=5 // pred_check
      %p229 = pneg %p228
    $region34: #{d_block.1} parent=5 // pred_check_branch
      %231 = sbr.rel (%p229) target = $region36
    $region35: #{d_block.1} parent=5 // pred_region
      // Predicated region
      $region37: #{d_block.1} parent=35 // pred_check
        %p232 = pneg %p35
      $region38: #{d_block.1} parent=35 // pred_check_branch
        %234 = sbr.rel (%p232) target = $region40
      $region39: #{d_block.1} parent=35 // pred_region
        %p235 = scmp.lt.s32.totalorder %s15, 1
        %s236 = scalar_select %p235, %s15, 1
        %s237 = smul.addr %s236, 18
        %s238 = smul.addr %s237, 4
        %s239 = scalar_lea.vmem %s0, %s238
      $region40: #{d_block.1} parent=35 // pred_fallthru
        _
      // Predicated region
      $region41: #{d_block.1} parent=35 // pred_check
        %p240 = pneg %p61
      $region42: #{d_block.1} parent=35 // pred_check_branch
        %242 = sbr.rel (%p240) target = $region44
      $region43: #{d_block.1} parent=35 // pred_region
        %p243 = scmp.lt.s32.totalorder %s15, 1
        %s244 = scalar_select %p243, %s15, 1
        %s245 = smul.addr %s244, 8
        %s246 = smul.addr %s245, 4
        %s247 = scalar_lea.vmem %s1, %s246
      $region44: #{d_block.1} parent=35 // pred_fallthru
        _
    $region36: #{d_block.1} parent=5 // pred_fallthru
      _
    %p248 = scmp.le.s32.totalorder 1, %s15
    %p249 = scmp.lt.s32.totalorder %s15, 3
    %p250 = pnand %p248, %p249
    %p251 = pneg %p250
    // Predicated region
    $region45: #{d_block.1} parent=5 // pred_check
      _
    $region46: #{d_block.1} parent=5 // pred_check_branch
      %253 = sbr.rel (%p250) target = $region48
    $region47: #{d_block.1} parent=5 // pred_region
      %s254 = ssub.s32 %s15, 1
      %p255 = scmp.lt.s32.totalorder %s20, 1
      %s256 = scalar_select %p255, %s20, 1
      %s257 = smul.addr %s256, 18
      %s258 = smul.addr %s257, 4
      %s259 = scalar_lea.vmem %s0, %s258
      %p260 = pneg %p41
      %p261 = pneg %p38
      %p262 = scmp.lt.s32.totalorder %s20, 1
      %s263 = scalar_select %p262, %s20, 1
      %s264 = smul.addr %s263, 8
      %s265 = smul.addr %s264, 4
      %s266 = scalar_lea.vmem %s1, %s265
      %p267 = pneg %p67
      %p268 = pneg %p64
      %p269 = pneg %p88
      %p270 = pneg %p85
      %p271 = pneg %p109
      %p272 = pneg %p106
      %p273 = pneg %p130
      %p274 = pneg %p127
      %p275 = pneg %p151
      %p276 = pneg %p148
      %p277 = pneg %p172
      %p278 = pneg %p169
      %p279 = pneg %p198
      %p280 = pneg %p195
      %p281 = scmp.lt.s32.totalorder %s20, 1
      %s282 = scalar_select %p281, %s20, 1
      %s283 = smul.addr %s282, 8
      %s284 = smul.addr %s283, 8
      %s285 = scalar_lea.vmem %s7, %s284
      %p286 = scmp.lt.s32.totalorder %s20, 1
      %s287 = scalar_select %p286, %s20, 1
      %s288 = smul.addr %s287, 18
      %s289 = smul.addr %s288, 4
      %s290 = scalar_lea.vmem %s0, %s289
      %p291 = scmp.lt.s32.totalorder %s20, 1
      %s292 = scalar_select %p291, %s20, 1
      %s293 = smul.addr %s292, 8
      %s294 = smul.addr %s293, 4
      %s295 = scalar_lea.vmem %s1, %s294
      %p296 = scmp.lt.s32.totalorder %s20, 1
      %s297 = scalar_select %p296, %s20, 1
      %s298 = smul.addr %s297, 8
      %s299 = smul.addr %s298, 8
      %s300 = scalar_lea.vmem %s7, %s299
      %v302 = vld [vmem:[%s290] sm:$0xf]
      %v303 = vld [vmem:[%s290 + $0x4] sm:$0x1]
      %v304 = vld [vmem:[%s290 + $0x8] sm:$0xf]
      %v305 = vld [vmem:[%s290 + $0xc] sm:$0x1]
      %v306 = vld [vmem:[%s290 + $0x10] sm:$0xf]
      %v307 = vld [vmem:[%s290 + $0x14] sm:$0x1]
      %v308 = vld [vmem:[%s290 + $0x18] sm:$0xf]
      %v309 = vld [vmem:[%s290 + $0x1c] sm:$0x1]
      %v310 = vld [vmem:[%s290 + $0x20] sm:$0xf]
      %v311 = vld [vmem:[%s290 + $0x24] sm:$0x1]
      %v312 = vld [vmem:[%s290 + $0x28] sm:$0xf]
      %v313 = vld [vmem:[%s290 + $0x2c] sm:$0x1]
      %v314 = vld [vmem:[%s290 + $0x30] sm:$0xf]
      %v315 = vld [vmem:[%s290 + $0x34] sm:$0x1]
      %v316 = vld [vmem:[%s290 + $0x38] sm:$0xf]
      %v317 = vld [vmem:[%s290 + $0x3c] sm:$0x1]
      %v318 = vld [vmem:[%s290 + $0x40] sm:$0xf]
      %v319 = vld [vmem:[%s290 + $0x44] sm:$0x1]
      %vm320 = vsmask.f32 3328
      %vm321 = vsmask.f32 7440
      %vm322 = vmor %vm320, %vm321
      %v324 = vshrl.u32 %v302, 16
      %v326 = vrot.slane %v324, 4
      %v327 = vshll.u32 %v302, 16
      %v329 = vrot.slane %v327, 5
      %v330 = vor.u32 %v326, %v329
      %v331 = vrot.slane %v330, 4
      %v333 = vshll.u32 %v303, 16
      %v335 = vrot.slane %v333, 5
      %v336 = vsel %vm322, %v331, %v335
      %v338 = vshrl.u32 %v304, 16
      %v340 = vrot.slane %v338, 4
      %v341 = vshll.u32 %v304, 16
      %v343 = vrot.slane %v341, 5
      %v344 = vor.u32 %v340, %v343
      %v345 = vrot.slane %v344, 4
      %v347 = vshll.u32 %v305, 16
      %v349 = vrot.slane %v347, 5
      %v350 = vsel %vm322, %v345, %v349
      %v352 = vshrl.u32 %v306, 16
      %v354 = vrot.slane %v352, 4
      %v355 = vshll.u32 %v306, 16
      %v357 = vrot.slane %v355, 5
      %v358 = vor.u32 %v354, %v357
      %v359 = vrot.slane %v358, 4
      %v361 = vshll.u32 %v307, 16
      %v363 = vrot.slane %v361, 5
      %v364 = vsel %vm322, %v359, %v363
      %v366 = vshrl.u32 %v308, 16
      %v368 = vrot.slane %v366, 4
      %v369 = vshll.u32 %v308, 16
      %v371 = vrot.slane %v369, 5
      %v372 = vor.u32 %v368, %v371
      %v373 = vrot.slane %v372, 4
      %v375 = vshll.u32 %v309, 16
      %v377 = vrot.slane %v375, 5
      %v378 = vsel %vm322, %v373, %v377
      %v380 = vshrl.u32 %v310, 16
      %v382 = vrot.slane %v380, 4
      %v383 = vshll.u32 %v310, 16
      %v385 = vrot.slane %v383, 5
      %v386 = vor.u32 %v382, %v385
      %v387 = vrot.slane %v386, 4
      %v389 = vshll.u32 %v311, 16
      %v391 = vrot.slane %v389, 5
      %v392 = vsel %vm322, %v387, %v391
      %v394 = vshrl.u32 %v312, 16
      %v396 = vrot.slane %v394, 4
      %v397 = vshll.u32 %v312, 16
      %v399 = vrot.slane %v397, 5
      %v400 = vor.u32 %v396, %v399
      %v401 = vrot.slane %v400, 4
      %v403 = vshll.u32 %v313, 16
      %v405 = vrot.slane %v403, 5
      %v406 = vsel %vm322, %v401, %v405
      %v408 = vshrl.u32 %v314, 16
      %v410 = vrot.slane %v408, 4
      %v411 = vshll.u32 %v314, 16
      %v413 = vrot.slane %v411, 5
      %v414 = vor.u32 %v410, %v413
      %v415 = vrot.slane %v414, 4
      %v417 = vshll.u32 %v315, 16
      %v419 = vrot.slane %v417, 5
      %v420 = vsel %vm322, %v415, %v419
      %v422 = vshrl.u32 %v316, 16
      %v424 = vrot.slane %v422, 4
      %v425 = vshll.u32 %v316, 16
      %v427 = vrot.slane %v425, 5
      %v428 = vor.u32 %v424, %v427
      %v429 = vrot.slane %v428, 4
      %v431 = vshll.u32 %v317, 16
      %v433 = vrot.slane %v431, 5
      %v434 = vsel %vm322, %v429, %v433
      %v436 = vshrl.u32 %v318, 16
      %v438 = vrot.slane %v436, 4
      %v439 = vshll.u32 %v318, 16
      %v441 = vrot.slane %v439, 5
      %v442 = vor.u32 %v438, %v441
      %v443 = vrot.slane %v442, 4
      %v445 = vshll.u32 %v319, 16
      %v447 = vrot.slane %v445, 5
      %v448 = vsel %vm322, %v443, %v447
      %v457 = vunpack.c.l.b16 %v302
      %v458 = vunpack.c.l.b16 %v304
      %v459 = vunpack.c.l.b16 %v306
      %v460 = vunpack.c.l.b16 %v308
      %v461 = vunpack.c.l.b16 %v310
      %v462 = vunpack.c.l.b16 %v312
      %v463 = vunpack.c.l.b16 %v314
      %v464 = vunpack.c.l.b16 %v316
      %v465 = vpack.c.b16 %v458, %v457
      %v466 = vpack.c.b16 %v460, %v459
      %v467 = vpack.c.b16 %v462, %v461
      %v468 = vpack.c.b16 %v464, %v463
      %v469 = vunpack.c.l.b16 %v336
      %v470 = vunpack.c.l.b16 %v350
      %v471 = vunpack.c.l.b16 %v364
      %v472 = vunpack.c.l.b16 %v378
      %v473 = vunpack.c.l.b16 %v392
      %v474 = vunpack.c.l.b16 %v406
      %v475 = vunpack.c.l.b16 %v420
      %v476 = vunpack.c.l.b16 %v434
      %v477 = vpack.c.b16 %v470, %v469
      %v478 = vpack.c.b16 %v472, %v471
      %v479 = vpack.c.b16 %v474, %v473
      %v480 = vpack.c.b16 %v476, %v475
      %481 = vrot.lane.b32.xlu0 %v477, 16
      %v482 = vpop.permute.xlu0 %481
      %483 = vrot.lane.b32.xlu0 %v478, 16
      %v484 = vpop.permute.xlu0 %483
      %485 = vrot.lane.b32.xlu0 %v479, 16
      %v486 = vpop.permute.xlu0 %485
      %487 = vrot.lane.b32.xlu0 %v480, 16
      %v488 = vpop.permute.xlu0 %487
      %v490 = vunpack.c.l.b16 %v318
      %v491 = vpack.c.b16 %v459, %v458
      %v492 = vpack.c.b16 %v461, %v460
      %v493 = vpack.c.b16 %v463, %v462
      %v494 = vpack.c.b16 %v490, %v464
      %495 = vrot.lane.b32.xlu0 %v491, 32
      %v496 = vpop.permute.xlu0 %495
      %497 = vrot.lane.b32.xlu0 %v492, 32
      %v498 = vpop.permute.xlu0 %497
      %499 = vrot.lane.b32.xlu0 %v493, 32
      %v500 = vpop.permute.xlu0 %499
      %501 = vrot.lane.b32.xlu0 %v494, 32
      %v502 = vpop.permute.xlu0 %501
      %v503 = vunpack.c.l.b16 %v448
      %v504 = vpack.c.b16 %v471, %v470
      %v505 = vpack.c.b16 %v473, %v472
      %v506 = vpack.c.b16 %v475, %v474
      %v507 = vpack.c.b16 %v503, %v476
      %508 = vrot.lane.b32.xlu0 %v504, 48
      %v509 = vpop.permute.xlu0 %508
      %510 = vrot.lane.b32.xlu0 %v505, 48
      %v511 = vpop.permute.xlu0 %510
      %512 = vrot.lane.b32.xlu0 %v506, 48
      %v513 = vpop.permute.xlu0 %512
      %514 = vrot.lane.b32.xlu0 %v507, 48
      %v515 = vpop.permute.xlu0 %514
      %vm516 = vcmask 130048
      %v519 = vsel %vm516, %v465, %v482
      %v522 = vsel %vm516, %v466, %v484
      %v525 = vsel %vm516, %v467, %v486
      %v528 = vsel %vm516, %v468, %v488
      %vm529 = vcmask 261120
      %v531 = vsel %vm529, %v519, %v496
      %v533 = vsel %vm529, %v522, %v498
      %v535 = vsel %vm529, %v525, %v500
      %v537 = vsel %vm529, %v528, %v502
      %vm538 = vcmask 392192
      %v540 = vsel %vm538, %v531, %v509
      %v542 = vsel %vm538, %v533, %v511
      %v544 = vsel %vm538, %v535, %v513
      %v546 = vsel %vm538, %v537, %v515
      %v547 = vld [vmem:[%s2] sm:$0xf]
      %v548 = vld [vmem:[%s2 + $0x4] sm:$0xf]
      %v549 = vld [vmem:[%s2 + $0x8] sm:$0xf]
      %v550 = vld [vmem:[%s2 + $0xc] sm:$0xf]
      %v551 = vld [vmem:[%s2 + $0x10] sm:$0xf]
      %v552 = vld [vmem:[%s2 + $0x14] sm:$0xf]
      %v553 = vld [vmem:[%s2 + $0x18] sm:$0xf]
      %v554 = vld [vmem:[%s2 + $0x1c] sm:$0xf]
      %v563 = vunpack.c.l.b16 %v547
      %v564 = vunpack.c.l.b16 %v548
      %v565 = vunpack.c.l.b16 %v549
      %v566 = vunpack.c.l.b16 %v550
      %v567 = vunpack.c.l.b16 %v551
      %v568 = vunpack.c.l.b16 %v552
      %v569 = vunpack.c.l.b16 %v553
      %v570 = vunpack.c.l.b16 %v554
      %v571 = vpack.c.b16 %v564, %v563
      %v572 = vpack.c.b16 %v566, %v565
      %v573 = vpack.c.b16 %v568, %v567
      %v574 = vpack.c.b16 %v570, %v569
      %vm579 = vcmask 523264
      %v580 = vsel %vm579, %v540, 0
      %v582 = vsel %vm579, %v542, 0
      %v584 = vsel %vm579, %v544, 0
      %v586 = vsel %vm579, %v546, 0
      %588 = vmatpush.bf16.msra.mxu0 0
      %589 = vmatpush.bf16.msra.mxu0 0
      %590 = vmatpush.bf16.msra.mxu0 0
      %591 = vmatpush.bf16.msra.mxu0 0
      %592 = vmatpush.bf16.msra.mxu0 %v574
      %593 = vmatpush.bf16.msra.mxu0 %v573
      %594 = vmatpush.bf16.msra.mxu0 %v572
      %595 = vmatpush.bf16.msra.mxu0 %v571
      %596 = vmatmul.bf16.gmra.mxu0 %v580
      %v597 = vpop.f32.mrf.mxu0
      %v598 = vadd.f32 0.0, %v597
      %v599 = vpop.f32.mrf.mxu0
      %v600 = vadd.f32 0.0, %v599
      %601 = vmatmul.bf16.gmra.mxu0 %v582
      %v602 = vpop.f32.mrf.mxu0
      %v603 = vadd.f32 0.0, %v602
      %v604 = vpop.f32.mrf.mxu0
      %v605 = vadd.f32 0.0, %v604
      %606 = vmatmul.bf16.gmra.mxu0 %v584
      %v607 = vpop.f32.mrf.mxu0
      %v608 = vadd.f32 0.0, %v607
      %v609 = vpop.f32.mrf.mxu0
      %v610 = vadd.f32 0.0, %v609
      %611 = vmatmul.bf16.gmra.mxu0 %v586
      %v612 = vpop.f32.mrf.mxu0
      %v613 = vadd.f32 0.0, %v612
      %v614 = vpop.f32.mrf.mxu0
      %v615 = vadd.f32 0.0, %v614
      %616 = vdwg.mxu0
      %vm617 = vcmp.ge.f32.partialorder %v598, 0.0
      %vm618 = vcmp.ge.f32.partialorder %v600, 0.0
      %vm619 = vcmp.ge.f32.partialorder %v603, 0.0
      %vm620 = vcmp.ge.f32.partialorder %v605, 0.0
      %vm621 = vcmp.ge.f32.partialorder %v608, 0.0
      %vm622 = vcmp.ge.f32.partialorder %v610, 0.0
      %vm623 = vcmp.ge.f32.partialorder %v613, 0.0
      %vm624 = vcmp.ge.f32.partialorder %v615, 0.0
      %v625 = vmul.f32 %v598, 0.2
      %v626 = vmul.f32 %v600, 0.2
      %v627 = vmul.f32 %v603, 0.2
      %v628 = vmul.f32 %v605, 0.2
      %v629 = vmul.f32 %v608, 0.2
      %v630 = vmul.f32 %v610, 0.2
      %v631 = vmul.f32 %v613, 0.2
      %v632 = vmul.f32 %v615, 0.2
      %v633 = vsel %vm617, %v598, %v625
      %v634 = vsel %vm618, %v600, %v626
      %v635 = vsel %vm619, %v603, %v627
      %v636 = vsel %vm620, %v605, %v628
      %v637 = vsel %vm621, %v608, %v629
      %v638 = vsel %vm622, %v610, %v630
      %v639 = vsel %vm623, %v613, %v631
      %v640 = vsel %vm624, %v615, %v632
      %v641 = vpack.c.bf16 %v633, %v633
      %v642 = vpack.c.bf16 %v634, %v634
      %v643 = vpack.c.bf16 %v635, %v635
      %v644 = vpack.c.bf16 %v636, %v636
      %v645 = vpack.c.bf16 %v637, %v637
      %v646 = vpack.c.bf16 %v638, %v638
      %v647 = vpack.c.bf16 %v639, %v639
      %v648 = vpack.c.bf16 %v640, %v640
      %v657 = vunpack.c.l.b16 %v641
      %v658 = vunpack.c.l.b16 %v642
      %v659 = vunpack.c.l.b16 %v643
      %v660 = vunpack.c.l.b16 %v644
      %v661 = vunpack.c.l.b16 %v645
      %v662 = vunpack.c.l.b16 %v646
      %v663 = vunpack.c.l.b16 %v647
      %v664 = vunpack.c.l.b16 %v648
      %v665 = vpack.c.b16 %v657, %v657
      %v666 = vpack.c.b16 %v658, %v658
      %v667 = vpack.c.b16 %v659, %v659
      %v668 = vpack.c.b16 %v660, %v660
      %v669 = vpack.c.b16 %v661, %v661
      %v670 = vpack.c.b16 %v662, %v662
      %v671 = vpack.c.b16 %v663, %v663
      %v672 = vpack.c.b16 %v664, %v664
      %v674 = vshrl.u32 %v665, 16
      %v676 = vrot.slane %v674, 7
      %v677 = vshll.u32 %v665, 16
      %v679 = vor.u32 %v676, %v677
      %v681 = vshrl.u32 %v666, 16
      %v683 = vrot.slane %v681, 7
      %v684 = vshll.u32 %v666, 16
      %v686 = vor.u32 %v683, %v684
      %v688 = vshrl.u32 %v667, 16
      %v690 = vrot.slane %v688, 7
      %v691 = vshll.u32 %v667, 16
      %v693 = vor.u32 %v690, %v691
      %v695 = vshrl.u32 %v668, 16
      %v697 = vrot.slane %v695, 7
      %v698 = vshll.u32 %v668, 16
      %v700 = vor.u32 %v697, %v698
      %v702 = vshrl.u32 %v669, 16
      %v704 = vrot.slane %v702, 7
      %v705 = vshll.u32 %v669, 16
      %v707 = vor.u32 %v704, %v705
      %v709 = vshrl.u32 %v670, 16
      %v711 = vrot.slane %v709, 7
      %v712 = vshll.u32 %v670, 16
      %v714 = vor.u32 %v711, %v712
      %v716 = vshrl.u32 %v671, 16
      %v718 = vrot.slane %v716, 7
      %v719 = vshll.u32 %v671, 16
      %v721 = vor.u32 %v718, %v719
      %v723 = vshrl.u32 %v672, 16
      %v725 = vrot.slane %v723, 7
      %v726 = vshll.u32 %v672, 16
      %v728 = vor.u32 %v725, %v726
      %vm737 = vcmask 1040384
      %vm738 = vsmask.f32 256
      %vm739 = vmand %vm737, %vm738
      %v740 = vsel %vm739, 0, %v679
      %v741 = vsel %vm739, 0, %v686
      %v742 = vsel %vm739, 0, %v693
      %v743 = vsel %vm739, 0, %v700
      %v744 = vsel %vm739, 0, %v707
      %v745 = vsel %vm739, 0, %v714
      %v746 = vsel %vm739, 0, %v721
      %v747 = vsel %vm739, 0, %v728
      %vm748 = vcmask 1044480
      %vm749 = vsmask.f32 4352
      %vm750 = vmand %vm748, %vm749
      %v751 = vsel %vm750, %v740, 0
      %v752 = vsel %vm750, %v741, 0
      %v753 = vsel %vm750, %v742, 0
      %v754 = vsel %vm750, %v743, 0
      %v755 = vsel %vm750, %v744, 0
      %v756 = vsel %vm750, %v745, 0
      %v757 = vsel %vm750, %v746, 0
      %v758 = vsel %vm750, %v747, 0
      %v767 = vunpack.c.l.b16 0
      %v768 = vunpack.c.h.b16 0
      %v769 = vunpack.c.l.b16 %v751
      %v770 = vunpack.c.h.b16 %v751
      %v771 = vunpack.c.l.b16 %v752
      %v772 = vunpack.c.h.b16 %v752
      %v773 = vunpack.c.l.b16 %v753
      %v774 = vunpack.c.h.b16 %v753
      %v775 = vunpack.c.l.b16 %v754
      %v776 = vunpack.c.h.b16 %v754
      %v777 = vunpack.c.l.b16 %v755
      %v778 = vunpack.c.h.b16 %v755
      %v779 = vunpack.c.l.b16 %v756
      %v780 = vunpack.c.h.b16 %v756
      %v781 = vunpack.c.l.b16 %v757
      %v782 = vunpack.c.h.b16 %v757
      %v783 = vpack.c.b16 %v767, %v767
      %v784 = vpack.c.b16 %v768, %v768
      %v785 = vpack.c.b16 %v769, %v769
      %v786 = vpack.c.b16 %v770, %v770
      %v787 = vpack.c.b16 %v771, %v771
      %v788 = vpack.c.b16 %v772, %v772
      %v789 = vpack.c.b16 %v773, %v773
      %v790 = vpack.c.b16 %v774, %v774
      %v791 = vpack.c.b16 %v775, %v775
      %v792 = vpack.c.b16 %v776, %v776
      %v793 = vpack.c.b16 %v777, %v777
      %v794 = vpack.c.b16 %v778, %v778
      %v795 = vpack.c.b16 %v779, %v779
      %v796 = vpack.c.b16 %v780, %v780
      %v797 = vpack.c.b16 %v781, %v781
      %v798 = vpack.c.b16 %v782, %v782
      %v800 = vshrl.u32 %v783, 16
      %v802 = vrot.slane %v800, 4
      %v803 = vshll.u32 %v783, 16
      %v805 = vrot.slane %v803, 5
      %v806 = vor.u32 %v802, %v805
      %v807 = vrot.slane %v806, 4
      %v809 = vshll.u32 %v784, 16
      %v811 = vrot.slane %v809, 5
      %v812 = vsel %vm322, %v807, %v811
      %v814 = vshrl.u32 %v785, 16
      %v816 = vrot.slane %v814, 4
      %v817 = vshll.u32 %v785, 16
      %v819 = vrot.slane %v817, 5
      %v820 = vor.u32 %v816, %v819
      %v821 = vrot.slane %v820, 4
      %v823 = vshll.u32 %v786, 16
      %v825 = vrot.slane %v823, 5
      %v826 = vsel %vm322, %v821, %v825
      %v828 = vshrl.u32 %v787, 16
      %v830 = vrot.slane %v828, 4
      %v831 = vshll.u32 %v787, 16
      %v833 = vrot.slane %v831, 5
      %v834 = vor.u32 %v830, %v833
      %v835 = vrot.slane %v834, 4
      %v837 = vshll.u32 %v788, 16
      %v839 = vrot.slane %v837, 5
      %v840 = vsel %vm322, %v835, %v839
      %v842 = vshrl.u32 %v789, 16
      %v844 = vrot.slane %v842, 4
      %v845 = vshll.u32 %v789, 16
      %v847 = vrot.slane %v845, 5
      %v848 = vor.u32 %v844, %v847
      %v849 = vrot.slane %v848, 4
      %v851 = vshll.u32 %v790, 16
      %v853 = vrot.slane %v851, 5
      %v854 = vsel %vm322, %v849, %v853
      %v856 = vshrl.u32 %v791, 16
      %v858 = vrot.slane %v856, 4
      %v859 = vshll.u32 %v791, 16
      %v861 = vrot.slane %v859, 5
      %v862 = vor.u32 %v858, %v861
      %v863 = vrot.slane %v862, 4
      %v865 = vshll.u32 %v792, 16
      %v867 = vrot.slane %v865, 5
      %v868 = vsel %vm322, %v863, %v867
      %v870 = vshrl.u32 %v793, 16
      %v872 = vrot.slane %v870, 4
      %v873 = vshll.u32 %v793, 16
      %v875 = vrot.slane %v873, 5
      %v876 = vor.u32 %v872, %v875
      %v877 = vrot.slane %v876, 4
      %v879 = vshll.u32 %v794, 16
      %v881 = vrot.slane %v879, 5
      %v882 = vsel %vm322, %v877, %v881
      %v884 = vshrl.u32 %v795, 16
      %v886 = vrot.slane %v884, 4
      %v887 = vshll.u32 %v795, 16
      %v889 = vrot.slane %v887, 5
      %v890 = vor.u32 %v886, %v889
      %v891 = vrot.slane %v890, 4
      %v893 = vshll.u32 %v796, 16
      %v895 = vrot.slane %v893, 5
      %v896 = vsel %vm322, %v891, %v895
      %v898 = vshrl.u32 %v797, 16
      %v900 = vrot.slane %v898, 4
      %v901 = vshll.u32 %v797, 16
      %v903 = vrot.slane %v901, 5
      %v904 = vor.u32 %v900, %v903
      %v905 = vrot.slane %v904, 4
      %v907 = vshll.u32 %v798, 16
      %v909 = vrot.slane %v907, 5
      %v910 = vsel %vm322, %v905, %v909
      %vm911 = vcmask 1042432
      %vm912 = vcmask 1046532
      %vm913 = vmor %vm911, %vm912
      %v914 = vrot.slane %v783, 5
      %v915 = vrot.slane %v914, 4
      %v916 = vrot.slane %v784, 5
      %v917 = vsel %vm913, %v915, %v916
      %v918 = vrot.slane %v785, 5
      %v919 = vrot.slane %v918, 4
      %v920 = vrot.slane %v786, 5
      %v921 = vsel %vm913, %v919, %v920
      %v922 = vrot.slane %v787, 5
      %v923 = vrot.slane %v922, 4
      %v924 = vrot.slane %v788, 5
      %v925 = vsel %vm913, %v923, %v924
      %v926 = vrot.slane %v789, 5
      %v927 = vrot.slane %v926, 4
      %v928 = vrot.slane %v790, 5
      %v929 = vsel %vm913, %v927, %v928
      %v930 = vrot.slane %v791, 5
      %v931 = vrot.slane %v930, 4
      %v932 = vrot.slane %v792, 5
      %v933 = vsel %vm913, %v931, %v932
      %v934 = vrot.slane %v793, 5
      %v935 = vrot.slane %v934, 4
      %v936 = vrot.slane %v794, 5
      %v937 = vsel %vm913, %v935, %v936
      %v938 = vrot.slane %v795, 5
      %v939 = vrot.slane %v938, 4
      %v940 = vrot.slane %v796, 5
      %v941 = vsel %vm913, %v939, %v940
      %v942 = vrot.slane %v797, 5
      %v943 = vrot.slane %v942, 4
      %v944 = vrot.slane %v798, 5
      %v945 = vsel %vm913, %v943, %v944
      %v947 = vunpack.c.l.b16 %v758
      %v948 = vunpack.c.h.b16 %v758
      %v949 = vpack.c.b16 %v947, %v947
      %v950 = vpack.c.b16 %v948, %v948
      %v952 = vshrl.u32 %v949, 16
      %v954 = vrot.slane %v952, 4
      %v955 = vshll.u32 %v949, 16
      %v957 = vrot.slane %v955, 5
      %v958 = vor.u32 %v954, %v957
      %v959 = vrot.slane %v958, 4
      %v961 = vshll.u32 %v950, 16
      %v963 = vrot.slane %v961, 5
      %v964 = vsel %vm322, %v959, %v963
      %v965 = vrot.slane %v949, 5
      %v966 = vrot.slane %v965, 4
      %v967 = vrot.slane %v950, 5
      %v968 = vsel %vm913, %v966, %v967
      %v969 = vpack.c.b16 %v769, %v767
      %v970 = vpack.c.b16 %v773, %v771
      %v971 = vpack.c.b16 %v777, %v775
      %v972 = vpack.c.b16 %v781, %v779
      %v973 = vunpack.c.l.b16 %v812
      %v974 = vunpack.c.l.b16 %v826
      %v975 = vunpack.c.l.b16 %v840
      %v976 = vunpack.c.l.b16 %v854
      %v977 = vunpack.c.l.b16 %v868
      %v978 = vunpack.c.l.b16 %v882
      %v979 = vunpack.c.l.b16 %v896
      %v980 = vunpack.c.l.b16 %v910
      %v981 = vpack.c.b16 %v974, %v973
      %v982 = vpack.c.b16 %v976, %v975
      %v983 = vpack.c.b16 %v978, %v977
      %v984 = vpack.c.b16 %v980, %v979
      %985 = vrot.lane.b32.xlu0 %v981, 8
      %v986 = vpop.permute.xlu0 %985
      %987 = vrot.lane.b32.xlu0 %v982, 8
      %v988 = vpop.permute.xlu0 %987
      %989 = vrot.lane.b32.xlu0 %v983, 8
      %v990 = vpop.permute.xlu0 %989
      %991 = vrot.lane.b32.xlu0 %v984, 8
      %v992 = vpop.permute.xlu0 %991
      %v993 = vunpack.c.l.b16 %v917
      %v994 = vunpack.c.l.b16 %v921
      %v995 = vunpack.c.l.b16 %v925
      %v996 = vunpack.c.l.b16 %v929
      %v997 = vunpack.c.l.b16 %v933
      %v998 = vunpack.c.l.b16 %v937
      %v999 = vunpack.c.l.b16 %v941
      %v1000 = vunpack.c.l.b16 %v945
      %v1001 = vpack.c.b16 %v994, %v993
      %v1002 = vpack.c.b16 %v996, %v995
      %v1003 = vpack.c.b16 %v998, %v997
      %v1004 = vpack.c.b16 %v1000, %v999
      %1005 = vrot.lane.b32.xlu0 %v1001, 16
      %v1006 = vpop.permute.xlu0 %1005
      %1007 = vrot.lane.b32.xlu0 %v1002, 16
      %v1008 = vpop.permute.xlu0 %1007
      %1009 = vrot.lane.b32.xlu0 %v1003, 16
      %v1010 = vpop.permute.xlu0 %1009
      %1011 = vrot.lane.b32.xlu0 %v1004, 16
      %v1012 = vpop.permute.xlu0 %1011
      %v1013 = vpack.c.b16 %v771, %v769
      %v1014 = vpack.c.b16 %v775, %v773
      %v1015 = vpack.c.b16 %v779, %v777
      %v1016 = vpack.c.b16 %v947, %v781
      %1017 = vrot.lane.b32.xlu0 %v1013, 24
      %v1018 = vpop.permute.xlu0 %1017
      %1019 = vrot.lane.b32.xlu0 %v1014, 24
      %v1020 = vpop.permute.xlu0 %1019
      %1021 = vrot.lane.b32.xlu0 %v1015, 24
      %v1022 = vpop.permute.xlu0 %1021
      %1023 = vrot.lane.b32.xlu0 %v1016, 24
      %v1024 = vpop.permute.xlu0 %1023
      %v1025 = vunpack.c.l.b16 %v964
      %v1026 = vpack.c.b16 %v975, %v974
      %v1027 = vpack.c.b16 %v977, %v976
      %v1028 = vpack.c.b16 %v979, %v978
      %v1029 = vpack.c.b16 %v1025, %v980
      %1030 = vrot.lane.b32.xlu0 %v1026, 32
      %v1031 = vpop.permute.xlu0 %1030
      %1032 = vrot.lane.b32.xlu0 %v1027, 32
      %v1033 = vpop.permute.xlu0 %1032
      %1034 = vrot.lane.b32.xlu0 %v1028, 32
      %v1035 = vpop.permute.xlu0 %1034
      %1036 = vrot.lane.b32.xlu0 %v1029, 32
      %v1037 = vpop.permute.xlu0 %1036
      %v1038 = vunpack.c.l.b16 %v968
      %v1039 = vpack.c.b16 %v995, %v994
      %v1040 = vpack.c.b16 %v997, %v996
      %v1041 = vpack.c.b16 %v999, %v998
      %v1042 = vpack.c.b16 %v1038, %v1000
      %1043 = vrot.lane.b32.xlu0 %v1039, 40
      %v1044 = vpop.permute.xlu0 %1043
      %1045 = vrot.lane.b32.xlu0 %v1040, 40
      %v1046 = vpop.permute.xlu0 %1045
      %1047 = vrot.lane.b32.xlu0 %v1041, 40
      %v1048 = vpop.permute.xlu0 %1047
      %1049 = vrot.lane.b32.xlu0 %v1042, 40
      %v1050 = vpop.permute.xlu0 %1049
      %v1051 = vpack.c.b16 %v767, %v947
      %1052 = vrot.lane.b32.xlu0 %v970, 48
      %v1053 = vpop.permute.xlu0 %1052
      %1054 = vrot.lane.b32.xlu0 %v971, 48
      %v1055 = vpop.permute.xlu0 %1054
      %1056 = vrot.lane.b32.xlu0 %v972, 48
      %v1057 = vpop.permute.xlu0 %1056
      %1058 = vrot.lane.b32.xlu0 %v1051, 48
      %v1059 = vpop.permute.xlu0 %1058
      %v1060 = vpack.c.b16 %v973, %v1025
      %1061 = vrot.lane.b32.xlu0 %v982, 56
      %v1062 = vpop.permute.xlu0 %1061
      %1063 = vrot.lane.b32.xlu0 %v983, 56
      %v1064 = vpop.permute.xlu0 %1063
      %1065 = vrot.lane.b32.xlu0 %v984, 56
      %v1066 = vpop.permute.xlu0 %1065
      %1067 = vrot.lane.b32.xlu0 %v1060, 56
      %v1068 = vpop.permute.xlu0 %1067
      %v1069 = vpack.c.b16 %v993, %v1038
      %1070 = vrot.lane.b32.xlu0 %v1002, 64
      %v1071 = vpop.permute.xlu0 %1070
      %1072 = vrot.lane.b32.xlu0 %v1003, 64
      %v1073 = vpop.permute.xlu0 %1072
      %1074 = vrot.lane.b32.xlu0 %v1004, 64
      %v1075 = vpop.permute.xlu0 %1074
      %1076 = vrot.lane.b32.xlu0 %v1069, 64
      %v1077 = vpop.permute.xlu0 %1076
      %vm1078 = vcmask 64512
      %v1081 = vsel %vm1078, %v969, %v986
      %v1084 = vsel %vm1078, %v970, %v988
      %v1087 = vsel %vm1078, %v971, %v990
      %v1090 = vsel %vm1078, %v972, %v992
      %v1092 = vsel %vm516, %v1081, %v1006
      %v1094 = vsel %vm516, %v1084, %v1008
      %v1096 = vsel %vm516, %v1087, %v1010
      %v1098 = vsel %vm516, %v1090, %v1012
      %vm1099 = vcmask 195584
      %v1101 = vsel %vm1099, %v1092, %v1018
      %v1103 = vsel %vm1099, %v1094, %v1020
      %v1105 = vsel %vm1099, %v1096, %v1022
      %v1107 = vsel %vm1099, %v1098, %v1024
      %v1109 = vsel %vm529, %v1101, %v1031
      %v1111 = vsel %vm529, %v1103, %v1033
      %v1113 = vsel %vm529, %v1105, %v1035
      %v1115 = vsel %vm529, %v1107, %v1037
      %vm1116 = vcmask 326656
      %v1118 = vsel %vm1116, %v1109, %v1044
      %v1120 = vsel %vm1116, %v1111, %v1046
      %v1122 = vsel %vm1116, %v1113, %v1048
      %v1124 = vsel %vm1116, %v1115, %v1050
      %v1126 = vsel %vm538, %v1118, %v1053
      %v1128 = vsel %vm538, %v1120, %v1055
      %v1130 = vsel %vm538, %v1122, %v1057
      %v1132 = vsel %vm538, %v1124, %v1059
      %vm1133 = vcmask 457728
      %v1135 = vsel %vm1133, %v1126, %v1062
      %v1137 = vsel %vm1133, %v1128, %v1064
      %v1139 = vsel %vm1133, %v1130, %v1066
      %v1141 = vsel %vm1133, %v1132, %v1068
      %v1143 = vsel %vm579, %v1135, %v1071
      %v1145 = vsel %vm579, %v1137, %v1073
      %v1147 = vsel %vm579, %v1139, %v1075
      %v1149 = vsel %vm579, %v1141, %v1077
      %v1150 = vld [vmem:[%s3] sm:$0xf]
      %v1151 = vld [vmem:[%s3 + $0x4] sm:$0xf]
      %v1152 = vld [vmem:[%s3 + $0x8] sm:$0xf]
      %v1153 = vld [vmem:[%s3 + $0xc] sm:$0xf]
      %v1154 = vld [vmem:[%s3 + $0x10] sm:$0xf]
      %v1155 = vld [vmem:[%s3 + $0x14] sm:$0xf]
      %v1156 = vld [vmem:[%s3 + $0x18] sm:$0xf]
      %v1157 = vld [vmem:[%s3 + $0x1c] sm:$0xf]
      %v1158 = vld [vmem:[%s3 + $0x20] sm:$0xf]
      %v1168 = vunpack.c.l.b16 %v1150
      %v1169 = vunpack.c.l.b16 %v1151
      %v1170 = vunpack.c.l.b16 %v1152
      %v1171 = vunpack.c.l.b16 %v1153
      %v1172 = vunpack.c.l.b16 %v1154
      %v1173 = vunpack.c.l.b16 %v1155
      %v1174 = vunpack.c.l.b16 %v1156
      %v1175 = vunpack.c.l.b16 %v1157
      %v1176 = vunpack.c.l.b16 %v1158
      %v1177 = vpack.c.b16 %v1169, %v1168
      %v1178 = vpack.c.b16 %v1171, %v1170
      %v1179 = vpack.c.b16 %v1173, %v1172
      %v1180 = vpack.c.b16 %v1175, %v1174
      %v1181 = vpack.c.b16 %v1176, %v1176
      %vm1186 = vcmask 588800
      %v1187 = vsel %vm1186, %v1143, 0
      %v1189 = vsel %vm1186, %v1145, 0
      %v1191 = vsel %vm1186, %v1147, 0
      %v1193 = vsel %vm1186, %v1149, 0
      %vm1195 = vcmask 1043456
      %v1197 = vsel %vm1195, %v1181, 0
      %1199 = vmatpush.bf16.msra.mxu0 0
      %1200 = vmatpush.bf16.msra.mxu0 0
      %1201 = vmatpush.bf16.msra.mxu0 0
      %1202 = vmatpush.bf16.msra.mxu0 %v1197
      %1203 = vmatpush.bf16.msra.mxu0 %v1180
      %1204 = vmatpush.bf16.msra.mxu0 %v1179
      %1205 = vmatpush.bf16.msra.mxu0 %v1178
      %1206 = vmatpush.bf16.msra.mxu0 %v1177
      %1207 = vmatmul.bf16.gmra.mxu0 %v1187
      %v1208 = vpop.f32.mrf.mxu0
      %v1209 = vadd.f32 0.0, %v1208
      %v1210 = vpop.f32.mrf.mxu0
      %v1211 = vadd.f32 0.0, %v1210
      %1212 = vmatmul.bf16.gmra.mxu0 %v1189
      %v1213 = vpop.f32.mrf.mxu0
      %v1214 = vadd.f32 0.0, %v1213
      %v1215 = vpop.f32.mrf.mxu0
      %v1216 = vadd.f32 0.0, %v1215
      %1217 = vmatmul.bf16.gmra.mxu0 %v1191
      %v1218 = vpop.f32.mrf.mxu0
      %v1219 = vadd.f32 0.0, %v1218
      %v1220 = vpop.f32.mrf.mxu0
      %v1221 = vadd.f32 0.0, %v1220
      %1222 = vmatmul.bf16.gmra.mxu0 %v1193
      %v1223 = vpop.f32.mrf.mxu0
      %v1224 = vadd.f32 0.0, %v1223
      %v1225 = vpop.f32.mrf.mxu0
      %v1226 = vadd.f32 0.0, %v1225
      %1227 = vdwg.mxu0
      %vm1228 = vcmp.ge.f32.partialorder %v1209, 0.0
      %vm1229 = vcmp.ge.f32.partialorder %v1211, 0.0
      %vm1230 = vcmp.ge.f32.partialorder %v1214, 0.0
      %vm1231 = vcmp.ge.f32.partialorder %v1216, 0.0
      %vm1232 = vcmp.ge.f32.partialorder %v1219, 0.0
      %vm1233 = vcmp.ge.f32.partialorder %v1221, 0.0
      %vm1234 = vcmp.ge.f32.partialorder %v1224, 0.0
      %vm1235 = vcmp.ge.f32.partialorder %v1226, 0.0
      %v1236 = vmul.f32 %v1209, 0.2
      %v1237 = vmul.f32 %v1211, 0.2
      %v1238 = vmul.f32 %v1214, 0.2
      %v1239 = vmul.f32 %v1216, 0.2
      %v1240 = vmul.f32 %v1219, 0.2
      %v1241 = vmul.f32 %v1221, 0.2
      %v1242 = vmul.f32 %v1224, 0.2
      %v1243 = vmul.f32 %v1226, 0.2
      %v1244 = vsel %vm1228, %v1209, %v1236
      %v1245 = vsel %vm1229, %v1211, %v1237
      %v1246 = vsel %vm1230, %v1214, %v1238
      %v1247 = vsel %vm1231, %v1216, %v1239
      %v1248 = vsel %vm1232, %v1219, %v1240
      %v1249 = vsel %vm1233, %v1221, %v1241
      %v1250 = vsel %vm1234, %v1224, %v1242
      %v1251 = vsel %vm1235, %v1226, %v1243
      %v1252 = vld [vmem:[%s295] sm:$0xf]
      %v1253 = vld [vmem:[%s295 + $0x4] sm:$0xf]
      %v1254 = vld [vmem:[%s295 + $0x8] sm:$0xf]
      %v1255 = vld [vmem:[%s295 + $0xc] sm:$0xf]
      %v1256 = vld [vmem:[%s295 + $0x10] sm:$0xf]
      %v1257 = vld [vmem:[%s295 + $0x14] sm:$0xf]
      %v1258 = vld [vmem:[%s295 + $0x18] sm:$0xf]
      %v1259 = vld [vmem:[%s295 + $0x1c] sm:$0xf]
      %v1260 = vld [vmem:[%s4] sm:$0x3]
      %v1261 = vld [vmem:[%s5] sm:$0x1]
      %v1263 = vperm.slane %v1261, 0
      %v1273 = vunpack.c.l.b16 %v1252
      %v1274 = vunpack.c.l.b16 %v1253
      %v1275 = vunpack.c.l.b16 %v1254
      %v1276 = vunpack.c.l.b16 %v1255
      %v1277 = vunpack.c.l.b16 %v1256
      %v1278 = vunpack.c.l.b16 %v1257
      %v1279 = vunpack.c.l.b16 %v1258
      %v1280 = vunpack.c.l.b16 %v1259
      %v1281 = vpack.c.b16 %v1274, %v1273
      %v1282 = vpack.c.b16 %v1276, %v1275
      %v1283 = vpack.c.b16 %v1278, %v1277
      %v1284 = vpack.c.b16 %v1280, %v1279
      %vm1285 = vcmask 31744
      %v1287 = vsel %vm1285, %v1281, 0
      %v1290 = vsel %vm1285, %v1282, 0
      %v1293 = vsel %vm1285, %v1283, 0
      %v1296 = vsel %vm1285, %v1284, 0
      %vm1298 = vcmask 1041408
      %v1300 = vsel %vm1298, %v1260, 0
      %1302 = vmatpush.bf16.msra.mxu0 0
      %1303 = vmatpush.bf16.msra.mxu0 0
      %1304 = vmatpush.bf16.msra.mxu0 0
      %1305 = vmatpush.bf16.msra.mxu0 0
      %1306 = vmatpush.bf16.msra.mxu0 0
      %1307 = vmatpush.bf16.msra.mxu0 0
      %1308 = vmatpush.bf16.msra.mxu0 0
      %1309 = vmatpush.bf16.msra.mxu0 %v1300
      %1310 = vmatmul.bf16.gmra.mxu0 %v1287
      %v1311 = vpop.f32.mrf.mxu0
      %v1312 = vadd.f32 %v1263, %v1311
      %v1313 = vpop.f32.mrf.mxu0
      %v1314 = vadd.f32 %v1263, %v1313
      %1315 = vmatmul.bf16.gmra.mxu0 %v1290
      %v1316 = vpop.f32.mrf.mxu0
      %v1317 = vadd.f32 %v1263, %v1316
      %v1318 = vpop.f32.mrf.mxu0
      %v1319 = vadd.f32 %v1263, %v1318
      %1320 = vmatmul.bf16.gmra.mxu0 %v1293
      %v1321 = vpop.f32.mrf.mxu0
      %v1322 = vadd.f32 %v1263, %v1321
      %v1323 = vpop.f32.mrf.mxu0
      %v1324 = vadd.f32 %v1263, %v1323
      %1325 = vmatmul.bf16.gmra.mxu0 %v1296
      %v1326 = vpop.f32.mrf.mxu0
      %v1327 = vadd.f32 %v1263, %v1326
      %v1328 = vpop.f32.mrf.mxu0
      %v1329 = vadd.f32 %v1263, %v1328
      %1330 = vdwg.mxu0
      %v1331 = vld [vmem:[#allocation2] sm:$0x1]
      %v1333 = vperm.slane %v1331, 0
      %1334 = vset.pattern.permute.xlu0 0
      %1335 = vperm.xlu0 %1334, %v1333
      %v1336 = vpop.permute.xlu0 %1335
      %v1338 = vmul.f32 %v1336, %v1244
      %v1339 = vmul.f32 %v1336, %v1245
      %v1340 = vmul.f32 %v1336, %v1246
      %v1341 = vmul.f32 %v1336, %v1247
      %v1342 = vmul.f32 %v1336, %v1248
      %v1343 = vmul.f32 %v1336, %v1249
      %v1344 = vmul.f32 %v1336, %v1250
      %v1345 = vmul.f32 %v1336, %v1251
      %v1346 = vadd.f32 %v1312, %v1338
      %v1347 = vadd.f32 %v1314, %v1339
      %v1348 = vadd.f32 %v1317, %v1340
      %v1349 = vadd.f32 %v1319, %v1341
      %v1350 = vadd.f32 %v1322, %v1342
      %v1351 = vadd.f32 %v1324, %v1343
      %v1352 = vadd.f32 %v1327, %v1344
      %v1353 = vadd.f32 %v1329, %v1345
      %1354 = vst.msk [vmem:[%s300] sm:$0xff] %vm1078, %v1346
      %1355 = vst.msk [vmem:[%s300 + $0x8] sm:$0xff] %vm1078, %v1347
      %1356 = vst.msk [vmem:[%s300 + $0x10] sm:$0xff] %vm1078, %v1348
      %1357 = vst.msk [vmem:[%s300 + $0x18] sm:$0xff] %vm1078, %v1349
      %1358 = vst.msk [vmem:[%s300 + $0x20] sm:$0xff] %vm1078, %v1350
      %1359 = vst.msk [vmem:[%s300 + $0x28] sm:$0xff] %vm1078, %v1351
      %1360 = vst.msk [vmem:[%s300 + $0x30] sm:$0xff] %vm1078, %v1352
      %1361 = vst.msk [vmem:[%s300 + $0x38] sm:$0xff] %vm1078, %v1353
      %p1362 = scmp.lt.s32.totalorder %s20, 1
      %s1363 = scalar_select %p1362, %s20, 1
      %s1364 = smul.addr %s1363, 8
      %s1365 = smul.addr %s1364, 8
      %s1366 = scalar_lea.vmem %s7, %s1365
      // Predicated region
      $region49: #{d_block.1} parent=47 // pred_check
        %p1367 = pneg %p195
      $region50: #{d_block.1} parent=47 // pred_check_branch
        %1369 = sbr.rel (%p1367) target = $region52
      $region51: #{d_block.1} parent=47 // pred_region
        _
      $region52: #{d_block.1} parent=47 // pred_fallthru
        _
    $region48: #{d_block.1} parent=5 // pred_fallthru
      _
    %p1370 = scmp.le.s32.totalorder 2, %s15
    // Predicated region
    $region53: #{d_block.1} parent=5 // pred_check
      %p1371 = pneg %p1370
    $region54: #{d_block.1} parent=5 // pred_check_branch
      %1373 = sbr.rel (%p1371) target = $region56
    $region55: #{d_block.1} parent=5 // pred_region
      %s1374 = ssub.s32 %s15, 2
      // Predicated region
      $region57: #{d_block.1} parent=55 // pred_check
        %p1375 = pneg %p201
      $region58: #{d_block.1} parent=55 // pred_check_branch
        %1377 = sbr.rel (%p1375) target = $region60
      $region59: #{d_block.1} parent=55 // pred_region
        %p1378 = scmp.lt.s32.totalorder %s21, 1
        %s1379 = scalar_select %p1378, %s21, 1
        %s1380 = smul.addr %s1379, 8
        %s1381 = smul.addr %s1380, 8
        %s1382 = scalar_lea.vmem %s7, %s1381
      $region60: #{d_block.1} parent=55 // pred_fallthru
        _
    $region56: #{d_block.1} parent=5 // pred_fallthru
      _
  $region6: #{d_block.1} parent=0 // loop_footer
    %s19 = sadd.s32 1, %s15
  $region7: #{d_block.1} parent=0 // loop_footer_branch
    %14 = sbr.rel target = $region3
  $region8: #{d_block.1} parent=0 // loop_exit
    _

</llo_original>
